<compile_context>
chip_gen: v5e
topology: v5e:2x2
jax: 0.10.0
libtpu: 0.0.40
codegen_flags: <defaults>
</compile_context>

<pallas_src>
import functools

import jax
import jax.numpy as jnp
from jax import lax
from jax.experimental import pallas as pl
from jax.experimental.pallas import tpu as pltpu


def _round_up(x, m):
    return ((x + m - 1) // m) * m


def _online_contrastive_kernel(
    emb_row_ref,   # (TM, DP)  row tile of embeddings
    lbl_row_ref,   # (TM, 1)   row labels
    sq_row_ref,    # (TM, 1)   precomputed row squared norms (f32)
    emb_t_ref,     # (DP, TN)  column tile of transposed embeddings
    lbl_col_ref,   # (1, TN)   column labels
    sq_col_ref,    # (1, TN)   precomputed column squared norms (f32)
    out_ref,       # (8, 128)  per-row-tile lane-dense partial-sum block
    *,
    batch,         # real (unpadded) batch size
    tile_rows,     # TM (multiple of 8)
    tile_cols,     # TN (multiple of 128)
    margin,        # contrastive margin (static python float)
    mm_dtype,      # None = keep input dtype for the matmul; else cast (e.g. bf16)
    precision,     # precision for the cross-term dot (None / lax.Precision.*)
):
    i = pl.program_id(0)   # row-tile index  ("parallel")
    j = pl.program_id(1)   # col-tile index  ("arbitrary" reduction)

    @pl.when(j == 0)
    def _():
        out_ref[...] = jnp.zeros_like(out_ref)

    # Upper-triangular block skip: a pair needs col > row, so any block whose
    # largest column index <= smallest row index contributes nothing.
    @pl.when((j + 1) * tile_cols - 1 > i * tile_rows)
    def _():
        rows = emb_row_ref[...]
        cols_t = emb_t_ref[...]
        if mm_dtype is not None:
            rows = rows.astype(mm_dtype)
            cols_t = cols_t.astype(mm_dtype)

        # Gram trick: d2 = |r|^2 + |c|^2 - 2 r.c ; cross term on the MXU
        # against the pre-transposed column tile.
        cross = jnp.dot(rows, cols_t,
                        preferred_element_type=jnp.float32,
                        precision=precision)                        # (TM, TN)
        d2 = jnp.maximum(sq_row_ref[...] + sq_col_ref[...] - 2.0 * cross, 0.0)
        dist = jnp.sqrt(d2)                                         # EUP
        hinge = jnp.maximum(margin - dist, 0.0)

        # Rank-1 masks: upper triangle restricted to the real batch.
        row_idx = i * tile_rows + lax.broadcasted_iota(jnp.int32, (tile_rows, 1), 0)
        col_idx = j * tile_cols + lax.broadcasted_iota(jnp.int32, (1, tile_cols), 1)
        valid = (col_idx > row_idx) & (row_idx < batch) & (col_idx < batch)
        same = lbl_row_ref[...] == lbl_col_ref[...]                 # (TM, TN)
        contrib = jnp.where(valid, jnp.where(same, d2, hinge * hinge), 0.0)

        # Fold (TM, TN) -> (8, 128) with tile-aligned static slices: pure VPU
        # vreg adds, no per-step XLU reduce, no masked sub-tile stores.
        lanes = contrib[:, 0:128]
        for k in range(1, tile_cols // 128):
            lanes = lanes + contrib[:, k * 128:(k + 1) * 128]       # (TM, 128)
        folded = lanes[0:8, :]
        for r in range(1, tile_rows // 8):
            folded = folded + lanes[r * 8:(r + 1) * 8, :]           # (8, 128)

        out_ref[...] += folded


def online_contrastive_loss(embeddings, target, *, margin,
                            tile_rows=256, tile_cols=512,
                            bf16_matmul=False, precision=None):
    """Pallas implementation of OnlineContrastiveLoss.forward (all-pairs selector).

    tile_rows: 256 recommended for v6e/v7x, 128 for v5e.
    tile_cols: column tile of the (tiled) transposed RHS; keeps VMEM independent of B.
    bf16_matmul: cast matmul operands to bf16 (v5e throughput; validate precision).
    precision:   dot precision (e.g. jax.lax.Precision.HIGHEST for the Gram trick).
    """
    B, D = embeddings.shape
    assert target.shape == (B,)
    assert B >= 2

    # Tile sizes: rows multiple of 8 sublanes, cols multiple of 128 lanes,
    # both capped at the (aligned) batch.
    tm = max(8, (min(int(tile_rows), _round_up(B, 8)) // 8) * 8)
    tn = max(128, (min(int(tile_cols), _round_up(B, 128)) // 128) * 128)
    b_rows = _round_up(B, tm)
    b_cols = _round_up(B, tn)          # lane-dense column padding
    d_pad = _round_up(D, 128)          # lane-dense feature padding (zeros don't change d2)

    lbl = target.astype(jnp.int32)
    emb = embeddings                    # keep native dtype; no host-side upcast
    sq = jnp.sum(emb.astype(jnp.float32) ** 2, axis=1)   # hoisted squared norms

    def pad2(a, r, c):
        return jnp.pad(a, ((0, r - a.shape[0]), (0, c - a.shape[1])))

    emb_rows = pad2(emb, b_rows, d_pad)                   # (b_rows, d_pad)
    emb_t = pad2(emb, b_cols, d_pad).T                    # (d_pad, b_cols), transposed once
    lbl_row = jnp.pad(lbl, (0, b_rows - B), constant_values=-1).reshape(b_rows, 1)
    lbl_col = jnp.pad(lbl, (0, b_cols - B), constant_values=-1).reshape(1, b_cols)
    sq_row = jnp.pad(sq, (0, b_rows - B)).reshape(b_rows, 1)
    sq_col = jnp.pad(sq, (0, b_cols - B)).reshape(1, b_cols)

    n_row = b_rows // tm
    n_col = b_cols // tn

    kernel = functools.partial(
        _online_contrastive_kernel,
        batch=B,
        tile_rows=tm,
        tile_cols=tn,
        margin=float(margin),
        mm_dtype=(jnp.bfloat16 if bf16_matmul else None),
        precision=precision,
    )

    # Explicit scoped-VMEM limit (v5e default is only 16 MiB); stay <= 64 MiB (v7x physical).
    esize = emb.dtype.itemsize
    per_buf = (tm * d_pad + d_pad * tn) * esize + (2 * tm + 2 * tn) * 4 + 8 * 128 * 4
    vmem_limit = int(min(64 * 1024 * 1024,
                         max(32 * 1024 * 1024, 2 * per_buf + 8 * tm * tn * 4 + (2 << 20))))

    cost = pl.CostEstimate(
        flops=2 * b_rows * b_cols * d_pad + 12 * b_rows * b_cols,
        transcendentals=b_rows * b_cols,
        bytes_accessed=esize * (n_col * b_rows * d_pad + n_row * d_pad * b_cols)
        + 4 * (n_col * b_rows + n_row * b_cols) + 4 * n_row * 8 * 128,
    )

    out = pl.pallas_call(
        kernel,
        out_shape=jax.ShapeDtypeStruct((n_row * 8, 128), jnp.float32),
        grid_spec=pltpu.PrefetchScalarGridSpec(
            num_scalar_prefetch=0,
            grid=(n_row, n_col),
            in_specs=[
                pl.BlockSpec((tm, d_pad), lambda i, j: (i, 0)),   # row tile
                pl.BlockSpec((tm, 1), lambda i, j: (i, 0)),       # row labels
                pl.BlockSpec((tm, 1), lambda i, j: (i, 0)),       # row norms
                pl.BlockSpec((d_pad, tn), lambda i, j: (0, j)),   # col tile of emb^T
                pl.BlockSpec((1, tn), lambda i, j: (0, j)),       # col labels
                pl.BlockSpec((1, tn), lambda i, j: (0, j)),       # col norms
            ],
            out_specs=pl.BlockSpec((8, 128), lambda i, j: (i, 0)),  # per-row-tile partials
        ),
        compiler_params=pltpu.CompilerParams(
            dimension_semantics=("parallel", "arbitrary"),
            vmem_limit_bytes=vmem_limit,
        ),
        cost_estimate=cost,
    )(emb_rows, lbl_row, sq_row, emb_t, lbl_col, sq_col)

    total_pairs = B * (B - 1) // 2
    return jnp.sum(out) / jnp.float32(total_pairs)


def _reference(embeddings, target, margin):
    """Pure-JAX reference mirroring the PyTorch forward (all-pairs selector)."""
    B = embeddings.shape[0]
    e = embeddings.astype(jnp.float32)
    diff = e[:, None, :] - e[None, :, :]
    d2 = jnp.sum(diff * diff, axis=-1)
    i = jnp.arange(B)[:, None]
    j = jnp.arange(B)[None, :]
    upper = j > i
    same = target[:, None] == target[None, :]
    pos = upper & same
    neg = upper & jnp.logical_not(same)
    pos_loss = jnp.where(pos, d2, 0.0)
    neg_loss = jnp.where(neg, jnp.maximum(margin - jnp.sqrt(d2), 0.0) ** 2, 0.0)
    total = jnp.sum(pos_loss) + jnp.sum(neg_loss)
    n_pairs = B * (B - 1) // 2
    return total / n_pairs


if __name__ == "__main__":
    batch = 200
    dim = 32
    margin = 1.0

    key = jax.random.PRNGKey(0)
    k1, k2 = jax.random.split(key)
    embeddings = jax.random.normal(k1, (batch, dim), dtype=jnp.float32)
    target = jax.random.randint(k2, (batch,), 0, 4, dtype=jnp.int32)

    ref = _reference(embeddings, target, margin)

    # Small tiles: 4x2 grid -> exercises the parallel row axis, the revisited
    # per-row-tile accumulator across column steps, triangular block skipping
    # (blocks (2,0) and (3,0) are skipped) and padded tail masking.
    loss_small = online_contrastive_loss(embeddings, target, margin=margin,
                                         tile_rows=64, tile_cols=128)
    loss_small = jax.block_until_ready(loss_small)
    assert jnp.allclose(loss_small, ref, rtol=1e-3, atol=1e-3), (loss_small, ref)

    # Default tiles (single block) as a second configuration check.
    loss_default = online_contrastive_loss(embeddings, target, margin=margin)
    loss_default = jax.block_until_ready(loss_default)
    assert jnp.allclose(loss_default, ref, rtol=1e-3, atol=1e-3), (loss_default, ref)

    print("KERNEL_OK")
</pallas_src>

<mosaic_0001>
module attributes {stable_mosaic.version = 11 : i64} {
  func.func @_online_contrastive_kernel(%arg0: i32, %arg1: i32, %arg2: memref<64x128xf32, #tpu.memory_space<vmem>>, %arg3: memref<64x1xi32, #tpu.memory_space<vmem>>, %arg4: memref<64x1xf32, #tpu.memory_space<vmem>>, %arg5: memref<128x128xf32, #tpu.memory_space<vmem>>, %arg6: memref<1x128xi32, #tpu.memory_space<vmem>>, %arg7: memref<1x128xf32, #tpu.memory_space<vmem>>, %arg8: memref<8x128xf32, #tpu.memory_space<vmem>>) attributes {dimension_semantics = [#tpu.dimension_semantics<parallel>, #tpu.dimension_semantics<arbitrary>], iteration_bounds = array<i64: 4, 2>, scalar_prefetch = 0 : i64, scratch_operands = 0 : i64, tpu.core_type = #tpu.core_type<tc>, window_params = [{transform_indices = @transform_0, window_bounds = array<i64: 64, 128>}, {transform_indices = @transform_1, window_bounds = array<i64: 64, 1>}, {transform_indices = @transform_2, window_bounds = array<i64: 64, 1>}, {transform_indices = @transform_3, window_bounds = array<i64: 128, 128>}, {transform_indices = @transform_4, window_bounds = array<i64: 1, 128>}, {transform_indices = @transform_5, window_bounds = array<i64: 1, 128>}, {transform_indices = @transform_6, window_bounds = array<i64: 8, 128>}]} {
    %c0_i32 = arith.constant 0 : i32
    %0 = arith.cmpi eq, %arg1, %c0_i32 : i32
    %1 = arith.extui %0 : i1 to i32
    %c0_i32_0 = arith.constant 0 : i32
    %2 = arith.cmpi ne, %1, %c0_i32_0 : i32
    scf.if %2 {
      %cst = arith.constant 0.000000e+00 : f32
      %10 = vector.broadcast %cst : f32 to vector<8x128xf32>
      %c0 = arith.constant 0 : index
      %c0_3 = arith.constant 0 : index
      %11 = vector.load %arg8[%c0, %c0_3] : memref<8x128xf32, #tpu.memory_space<vmem>>, vector<8x128xf32>
      tpu.vector_store %arg8[%c0, %c0_3], %10 {strides = array<i32>} : memref<8x128xf32, #tpu.memory_space<vmem>>, vector<8x128xf32>,
    } else {
    }
    %c1_i32 = arith.constant 1 : i32
    %3 = arith.addi %arg1, %c1_i32 : i32
    %c128_i32 = arith.constant 128 : i32
    %4 = arith.muli %3, %c128_i32 : i32
    %c1_i32_1 = arith.constant 1 : i32
    %5 = arith.subi %4, %c1_i32_1 : i32
    %c64_i32 = arith.constant 64 : i32
    %6 = arith.muli %arg0, %c64_i32 : i32
    %7 = arith.cmpi sgt, %5, %6 : i32
    %8 = arith.extui %7 : i1 to i32
    %c0_i32_2 = arith.constant 0 : i32
    %9 = arith.cmpi ne, %8, %c0_i32_2 : i32
    scf.if %9 {
      %c0 = arith.constant 0 : index
      %c0_3 = arith.constant 0 : index
      %10 = vector.load %arg2[%c0, %c0_3] : memref<64x128xf32, #tpu.memory_space<vmem>>, vector<64x128xf32>
      %c0_4 = arith.constant 0 : index
      %c0_5 = arith.constant 0 : index
      %11 = vector.load %arg5[%c0_4, %c0_5] : memref<128x128xf32, #tpu.memory_space<vmem>>, vector<128x128xf32>
      %cst = arith.constant dense<0.000000e+00> : vector<64x128xf32>
      %12 = tpu.matmul %10, %11, %cst {dimension_numbers = #tpu.dot_dimension_numbers<[1], [0], [0], [1], [0, 0, 1, 1], [], []>} : vector<64x128xf32>, vector<128x128xf32>, vector<64x128xf32> -> vector<64x128xf32>
      %c0_6 = arith.constant 0 : index
      %c0_7 = arith.constant 0 : index
      %13 = vector.load %arg4[%c0_6, %c0_7] : memref<64x1xf32, #tpu.memory_space<vmem>>, vector<64x1xf32>
      %c0_8 = arith.constant 0 : index
      %c0_9 = arith.constant 0 : index
      %14 = vector.load %arg7[%c0_8, %c0_9] : memref<1x128xf32, #tpu.memory_space<vmem>>, vector<1x128xf32>
      %15 = vector.broadcast %13 : vector<64x1xf32> to vector<64x128xf32>
      %16 = vector.broadcast %14 : vector<1x128xf32> to vector<64x128xf32>
      %17 = arith.addf %15, %16 : vector<64x128xf32>
      %cst_10 = arith.constant 2.000000e+00 : f32
      %18 = vector.broadcast %cst_10 : f32 to vector<64x128xf32>
      %19 = arith.mulf %18, %12 : vector<64x128xf32>
      %20 = arith.subf %17, %19 : vector<64x128xf32>
      %cst_11 = arith.constant 0.000000e+00 : f32
      %21 = vector.broadcast %cst_11 : f32 to vector<64x128xf32>
      %22 = arith.maximumf %20, %21 : vector<64x128xf32>
      %23 = math.sqrt %22 : vector<64x128xf32>
      %cst_12 = arith.constant 1.000000e+00 : f32
      %24 = vector.broadcast %cst_12 : f32 to vector<64x128xf32>
      %25 = arith.subf %24, %23 : vector<64x128xf32>
      %cst_13 = arith.constant 0.000000e+00 : f32
      %26 = vector.broadcast %cst_13 : f32 to vector<64x128xf32>
      %27 = arith.maximumf %25, %26 : vector<64x128xf32>
      %c64_i32_14 = arith.constant 64 : i32
      %28 = arith.muli %arg0, %c64_i32_14 : i32
      %29 = tpu.iota {dimensions = array<i32: 0>} : vector<64x1xi32>
      %30 = vector.broadcast %28 : i32 to vector<64x1xi32>
      %31 = arith.addi %30, %29 : vector<64x1xi32>
      %c128_i32_15 = arith.constant 128 : i32
      %32 = arith.muli %arg1, %c128_i32_15 : i32
      %33 = tpu.iota {dimensions = array<i32: 1>} : vector<1x128xi32>
      %34 = vector.broadcast %32 : i32 to vector<1x128xi32>
      %35 = arith.addi %34, %33 : vector<1x128xi32>
      %36 = vector.broadcast %35 : vector<1x128xi32> to vector<64x128xi32>
      %37 = vector.broadcast %31 : vector<64x1xi32> to vector<64x128xi32>
      %38 = arith.cmpi sgt, %36, %37 : vector<64x128xi32>
      %c200_i32 = arith.constant 200 : i32
      %39 = vector.broadcast %c200_i32 : i32 to vector<64x1xi32>
      %40 = arith.cmpi slt, %31, %39 : vector<64x1xi32>
      %41 = vector.broadcast %40 : vector<64x1xi1> to vector<64x128xi1>
      %42 = arith.andi %38, %41 : vector<64x128xi1>
      %c200_i32_16 = arith.constant 200 : i32
      %43 = vector.broadcast %c200_i32_16 : i32 to vector<1x128xi32>
      %44 = arith.cmpi slt, %35, %43 : vector<1x128xi32>
      %45 = vector.broadcast %44 : vector<1x128xi1> to vector<64x128xi1>
      %46 = arith.andi %42, %45 : vector<64x128xi1>
      %c0_17 = arith.constant 0 : index
      %c0_18 = arith.constant 0 : index
      %47 = vector.load %arg3[%c0_17, %c0_18] : memref<64x1xi32, #tpu.memory_space<vmem>>, vector<64x1xi32>
      %c0_19 = arith.constant 0 : index
      %c0_20 = arith.constant 0 : index
      %48 = vector.load %arg6[%c0_19, %c0_20] : memref<1x128xi32, #tpu.memory_space<vmem>>, vector<1x128xi32>
      %49 = vector.broadcast %47 : vector<64x1xi32> to vector<64x128xi32>
      %50 = vector.broadcast %48 : vector<1x128xi32> to vector<64x128xi32>
      %51 = arith.cmpi eq, %49, %50 : vector<64x128xi32>
      %52 = arith.mulf %27, %27 : vector<64x128xf32>
      %53 = arith.select %51, %22, %52 : vector<64x128xi1>, vector<64x128xf32>
      %cst_21 = arith.constant 0.000000e+00 : f32
      %54 = vector.broadcast %cst_21 : f32 to vector<64x128xf32>
      %55 = arith.select %46, %53, %54 : vector<64x128xi1>, vector<64x128xf32>
      %56 = vector.extract_strided_slice %55 {offsets = [0, 0], sizes = [8, 128], strides = [1, 1]} : vector<64x128xf32> to vector<8x128xf32>
      %57 = vector.extract_strided_slice %55 {offsets = [8, 0], sizes = [8, 128], strides = [1, 1]} : vector<64x128xf32> to vector<8x128xf32>
      %58 = arith.addf %56, %57 : vector<8x128xf32>
      %59 = vector.extract_strided_slice %55 {offsets = [16, 0], sizes = [8, 128], strides = [1, 1]} : vector<64x128xf32> to vector<8x128xf32>
      %60 = arith.addf %58, %59 : vector<8x128xf32>
      %61 = vector.extract_strided_slice %55 {offsets = [24, 0], sizes = [8, 128], strides = [1, 1]} : vector<64x128xf32> to vector<8x128xf32>
      %62 = arith.addf %60, %61 : vector<8x128xf32>
      %63 = vector.extract_strided_slice %55 {offsets = [32, 0], sizes = [8, 128], strides = [1, 1]} : vector<64x128xf32> to vector<8x128xf32>
      %64 = arith.addf %62, %63 : vector<8x128xf32>
      %65 = vector.extract_strided_slice %55 {offsets = [40, 0], sizes = [8, 128], strides = [1, 1]} : vector<64x128xf32> to vector<8x128xf32>
      %66 = arith.addf %64, %65 : vector<8x128xf32>
      %67 = vector.extract_strided_slice %55 {offsets = [48, 0], sizes = [8, 128], strides = [1, 1]} : vector<64x128xf32> to vector<8x128xf32>
      %68 = arith.addf %66, %67 : vector<8x128xf32>
      %69 = vector.extract_strided_slice %55 {offsets = [56, 0], sizes = [8, 128], strides = [1, 1]} : vector<64x128xf32> to vector<8x128xf32>
      %70 = arith.addf %68, %69 : vector<8x128xf32>
      %c0_22 = arith.constant 0 : index
      %c0_23 = arith.constant 0 : index
      %71 = vector.load %arg8[%c0_22, %c0_23] : memref<8x128xf32, #tpu.memory_space<vmem>>, vector<8x128xf32>
      %72 = arith.addf %71, %70 : vector<8x128xf32>
      %c0_24 = arith.constant 0 : index
      %c0_25 = arith.constant 0 : index
      %73 = vector.load %arg8[%c0_24, %c0_25] : memref<8x128xf32, #tpu.memory_space<vmem>>, vector<8x128xf32>
      tpu.vector_store %arg8[%c0_24, %c0_25], %72 {strides = array<i32>} : memref<8x128xf32, #tpu.memory_space<vmem>>, vector<8x128xf32>,
    } else {
    }
    return
  }
  func.func @transform_0(%arg0: i32, %arg1: i32) -> (i32, i32) {
    %c0_i32 = arith.constant 0 : i32
    %c0_i32_0 = arith.constant 0 : i32
    return %arg0, %c0_i32 : i32, i32
  }
  func.func @transform_1(%arg0: i32, %arg1: i32) -> (i32, i32) {
    %c0_i32 = arith.constant 0 : i32
    %c0_i32_0 = arith.constant 0 : i32
    return %arg0, %c0_i32 : i32, i32
  }
  func.func @transform_2(%arg0: i32, %arg1: i32) -> (i32, i32) {
    %c0_i32 = arith.constant 0 : i32
    %c0_i32_0 = arith.constant 0 : i32
    return %arg0, %c0_i32 : i32, i32
  }
  func.func @transform_3(%arg0: i32, %arg1: i32) -> (i32, i32) {
    %c0_i32 = arith.constant 0 : i32
    %c0_i32_0 = arith.constant 0 : i32
    return %c0_i32, %arg1 : i32, i32
  }
  func.func @transform_4(%arg0: i32, %arg1: i32) -> (i32, i32) {
    %c0_i32 = arith.constant 0 : i32
    %c0_i32_0 = arith.constant 0 : i32
    return %c0_i32, %arg1 : i32, i32
  }
  func.func @transform_5(%arg0: i32, %arg1: i32) -> (i32, i32) {
    %c0_i32 = arith.constant 0 : i32
    %c0_i32_0 = arith.constant 0 : i32
    return %c0_i32, %arg1 : i32, i32
  }
  func.func @transform_6(%arg0: i32, %arg1: i32) -> (i32, i32) {
    %c0_i32 = arith.constant 0 : i32
    %c0_i32_0 = arith.constant 0 : i32
    return %arg0, %c0_i32 : i32, i32
  }
}

</mosaic_0001>

<llo_original>
// kernel: tpu_custom_call.1
$region0: #{tpu_custom_call.1}
  #allocation0 [shape = 'u32[]', space=smem, size = 0x4, offset = 0x4, fixed_abs, tag = 'smem constant byte address 0x4 - core index']
  #allocation1 [shape = 'u32[72,128]{1,0:T(1,128)}', space=vmem, size = 0x9000, scoped, tag = 'internal scratch']
  %s0 = inlined_call_operand.vmem [shape: f32[256,128], index: 0, kind: input, shape index: {}]
  %s1 = inlined_call_operand.vmem [shape: s32[256,1], index: 1, kind: input, shape index: {}]
  %s2 = inlined_call_operand.vmem [shape: f32[256,1], index: 2, kind: input, shape index: {}]
  %s3 = inlined_call_operand.vmem [shape: f32[128,256], index: 3, kind: input, shape index: {}]
  %s4 = inlined_call_operand.vmem [shape: s32[1,256], index: 4, kind: input, shape index: {}]
  %s5 = inlined_call_operand.vmem [shape: f32[1,256], index: 5, kind: input, shape index: {}]
  %s6 = inlined_call_operand.hbm [shape: f32[32,128], index: 6, kind: output, shape index: {}]
  %s7 = sld [smem:[#allocation0]]
  $region103: #{tpu_custom_call.1} parent=0
    _
  %s9 = ssub.s32 1, %s7
  %s10 = scalar_select 0, %s9, %s7
  $region1: #{tpu_custom_call.1} parent=0
    #allocation2 [shape = 'u8[131072]{0}', space=vmem, size = 0x20000, scoped, tag = 'input window, operand 3']
    #allocation3 [shape = 'u8[8192]{0}', space=vmem, size = 0x2000, scoped, tag = 'output window, operand 0']
    #allocation4 [shape = 's32[2]{0}', space=sflag, size = 0x8, scoped, tag = 'scoped memory for tpu_custom_call.1']
    %11 = vsyncpa [#allocation4], 0
    %s12 = scalar_lea.sflag [#allocation4], 1
    %13 = vsyncpa %s12, 0
    loop: start=0, step=1, limit=10
    $region2: #{tpu_custom_call.1} parent=1 // loop_pre_header
      _
    $region3: #{tpu_custom_call.1} parent=1 // loop_header
      %s15 = sphi 0, %s19
      %p16 = scmp.ge.s32.totalorder %s15, 10
      %s22 = sphi 0, %s34
      %s23 = sphi 0, %s30
      %s24 = sphi 0, %s22
      %s25 = sphi 0, %s23
      %s26 = sphi 0, %s24
      %s27 = sphi 0, %s25
      %s37 = sphi 0, %s39
      %s40 = sphi 0, %s37
      %s41 = sphi 0, %s40
      %s57 = sphi 0, %s41
      %s63 = sphi 0, %s65
      %s66 = sphi 0, %s63
      %s67 = sphi 0, %s66
      %s83 = sphi 0, %s67
      %s89 = sphi 0, %s91
      %s92 = sphi 0, %s89
      %s93 = sphi 0, %s92
      %s109 = sphi 0, %s93
      %s115 = sphi 0, %s117
      %s118 = sphi 0, %s115
      %s119 = sphi 0, %s118
      %s135 = sphi 0, %s119
      %s141 = sphi 0, %s143
      %s144 = sphi 0, %s141
      %s145 = sphi 0, %s144
      %s161 = sphi 0, %s145
      %s167 = sphi 0, %s169
      %s170 = sphi 0, %s167
      %s171 = sphi 0, %s170
      %s187 = sphi 0, %s171
      %s193 = sphi 0, %s195
      %s196 = sphi 0, %s193
      %s197 = sphi 0, %s196
      %s213 = sphi 0, %s197
    $region4: #{tpu_custom_call.1} parent=1 // loop_header_branch
      %18 = sbr.rel (%p16) target = $region8
    $region5: #{tpu_custom_call.1} parent=1 // loop_body
      %s20 = ssub.s32 %s15, 1
      %s21 = ssub.s32 %s15, 2
      %s28 = sadd.s32 1, %s23
      %p29 = scmp.ge.s32.totalorder %s28, 2
      %s30 = scalar_select %p29, 0, %s28
      %s31 = sadd.s32 1, %s22
      %s32 = scalar_select %p29, %s31, %s22
      %p33 = scmp.ge.s32.totalorder %s32, 4
      %s34 = scalar_select %p33, 0, %s32
      %s35 = ssub.s32 %s22, %s34
      %p36 = scmp.eq.s32.totalorder %s35, 0
      %s38 = sadd.s32 %s37, 1
      %s39 = scalar_select %p36, %s37, %s38
      %p42 = pneg %p36
      %p43 = scmp.eq.s32.totalorder %s15, 7
      %p44 = por %p42, %p43
      %p45 = scmp.ne.s32.totalorder %s37, %s40
      %p46 = scmp.eq.s32.totalorder %s15, 0
      %p47 = por %p45, %p46
      %p48 = scmp.ne.s32.totalorder %s37, %s40
      %p49 = scmp.eq.s32.totalorder %s20, 7
      %p50 = por %p48, %p49
      %p51 = scmp.ne.s32.totalorder %s40, %s41
      %p52 = scmp.eq.s32.totalorder %s20, 0
      %p53 = por %p51, %p52
      %p54 = scmp.ne.s32.totalorder %s40, %s41
      %p55 = scmp.eq.s32.totalorder %s21, 7
      %p56 = por %p54, %p55
      %p58 = scmp.ne.s32.totalorder %s41, %s57
      %p59 = scmp.eq.s32.totalorder %s21, 0
      %p60 = por %p58, %p59
      %s61 = ssub.s32 %s22, %s34
      %p62 = scmp.eq.s32.totalorder %s61, 0
      %s64 = sadd.s32 %s63, 1
      %s65 = scalar_select %p62, %s63, %s64
      %p68 = pneg %p62
      %p69 = scmp.eq.s32.totalorder %s15, 7
      %p70 = por %p68, %p69
      %p71 = scmp.ne.s32.totalorder %s63, %s66
      %p72 = scmp.eq.s32.totalorder %s15, 0
      %p73 = por %p71, %p72
      %p74 = scmp.ne.s32.totalorder %s63, %s66
      %p75 = scmp.eq.s32.totalorder %s20, 7
      %p76 = por %p74, %p75
      %p77 = scmp.ne.s32.totalorder %s66, %s67
      %p78 = scmp.eq.s32.totalorder %s20, 0
      %p79 = por %p77, %p78
      %p80 = scmp.ne.s32.totalorder %s66, %s67
      %p81 = scmp.eq.s32.totalorder %s21, 7
      %p82 = por %p80, %p81
      %p84 = scmp.ne.s32.totalorder %s67, %s83
      %p85 = scmp.eq.s32.totalorder %s21, 0
      %p86 = por %p84, %p85
      %s87 = ssub.s32 %s22, %s34
      %p88 = scmp.eq.s32.totalorder %s87, 0
      %s90 = sadd.s32 %s89, 1
      %s91 = scalar_select %p88, %s89, %s90
      %p94 = pneg %p88
      %p95 = scmp.eq.s32.totalorder %s15, 7
      %p96 = por %p94, %p95
      %p97 = scmp.ne.s32.totalorder %s89, %s92
      %p98 = scmp.eq.s32.totalorder %s15, 0
      %p99 = por %p97, %p98
      %p100 = scmp.ne.s32.totalorder %s89, %s92
      %p101 = scmp.eq.s32.totalorder %s20, 7
      %p102 = por %p100, %p101
      %p103 = scmp.ne.s32.totalorder %s92, %s93
      %p104 = scmp.eq.s32.totalorder %s20, 0
      %p105 = por %p103, %p104
      %p106 = scmp.ne.s32.totalorder %s92, %s93
      %p107 = scmp.eq.s32.totalorder %s21, 7
      %p108 = por %p106, %p107
      %p110 = scmp.ne.s32.totalorder %s93, %s109
      %p111 = scmp.eq.s32.totalorder %s21, 0
      %p112 = por %p110, %p111
      %s113 = ssub.s32 %s23, %s30
      %p114 = scmp.eq.s32.totalorder %s113, 0
      %s116 = sadd.s32 %s115, 1
      %s117 = scalar_select %p114, %s115, %s116
      %p120 = pneg %p114
      %p121 = scmp.eq.s32.totalorder %s15, 7
      %p122 = por %p120, %p121
      %p123 = scmp.ne.s32.totalorder %s115, %s118
      %p124 = scmp.eq.s32.totalorder %s15, 0
      %p125 = por %p123, %p124
      %p126 = scmp.ne.s32.totalorder %s115, %s118
      %p127 = scmp.eq.s32.totalorder %s20, 7
      %p128 = por %p126, %p127
      %p129 = scmp.ne.s32.totalorder %s118, %s119
      %p130 = scmp.eq.s32.totalorder %s20, 0
      %p131 = por %p129, %p130
      %p132 = scmp.ne.s32.totalorder %s118, %s119
      %p133 = scmp.eq.s32.totalorder %s21, 7
      %p134 = por %p132, %p133
      %p136 = scmp.ne.s32.totalorder %s119, %s135
      %p137 = scmp.eq.s32.totalorder %s21, 0
      %p138 = por %p136, %p137
      %s139 = ssub.s32 %s23, %s30
      %p140 = scmp.eq.s32.totalorder %s139, 0
      %s142 = sadd.s32 %s141, 1
      %s143 = scalar_select %p140, %s141, %s142
      %p146 = pneg %p140
      %p147 = scmp.eq.s32.totalorder %s15, 7
      %p148 = por %p146, %p147
      %p149 = scmp.ne.s32.totalorder %s141, %s144
      %p150 = scmp.eq.s32.totalorder %s15, 0
      %p151 = por %p149, %p150
      %p152 = scmp.ne.s32.totalorder %s141, %s144
      %p153 = scmp.eq.s32.totalorder %s20, 7
      %p154 = por %p152, %p153
      %p155 = scmp.ne.s32.totalorder %s144, %s145
      %p156 = scmp.eq.s32.totalorder %s20, 0
      %p157 = por %p155, %p156
      %p158 = scmp.ne.s32.totalorder %s144, %s145
      %p159 = scmp.eq.s32.totalorder %s21, 7
      %p160 = por %p158, %p159
      %p162 = scmp.ne.s32.totalorder %s145, %s161
      %p163 = scmp.eq.s32.totalorder %s21, 0
      %p164 = por %p162, %p163
      %s165 = ssub.s32 %s23, %s30
      %p166 = scmp.eq.s32.totalorder %s165, 0
      %s168 = sadd.s32 %s167, 1
      %s169 = scalar_select %p166, %s167, %s168
      %p172 = pneg %p166
      %p173 = scmp.eq.s32.totalorder %s15, 7
      %p174 = por %p172, %p173
      %p175 = scmp.ne.s32.totalorder %s167, %s170
      %p176 = scmp.eq.s32.totalorder %s15, 0
      %p177 = por %p175, %p176
      %p178 = scmp.ne.s32.totalorder %s167, %s170
      %p179 = scmp.eq.s32.totalorder %s20, 7
      %p180 = por %p178, %p179
      %p181 = scmp.ne.s32.totalorder %s170, %s171
      %p182 = scmp.eq.s32.totalorder %s20, 0
      %p183 = por %p181, %p182
      %p184 = scmp.ne.s32.totalorder %s170, %s171
      %p185 = scmp.eq.s32.totalorder %s21, 7
      %p186 = por %p184, %p185
      %p188 = scmp.ne.s32.totalorder %s171, %s187
      %p189 = scmp.eq.s32.totalorder %s21, 0
      %p190 = por %p188, %p189
      %s191 = ssub.s32 %s22, %s34
      %p192 = scmp.eq.s32.totalorder %s191, 0
      %s194 = sadd.s32 %s193, 1
      %s195 = scalar_select %p192, %s193, %s194
      %p198 = pneg %p192
      %p199 = scmp.eq.s32.totalorder %s15, 7
      %p200 = por %p198, %p199
      %p201 = scmp.ne.s32.totalorder %s193, %s196
      %p202 = scmp.eq.s32.totalorder %s15, 0
      %p203 = por %p201, %p202
      %p204 = scmp.ne.s32.totalorder %s193, %s196
      %p205 = scmp.eq.s32.totalorder %s20, 7
      %p206 = por %p204, %p205
      %p207 = scmp.ne.s32.totalorder %s196, %s197
      %p208 = scmp.eq.s32.totalorder %s20, 0
      %p209 = por %p207, %p208
      %p210 = scmp.ne.s32.totalorder %s196, %s197
      %p211 = scmp.eq.s32.totalorder %s21, 7
      %p212 = por %p210, %p211
      %p214 = scmp.ne.s32.totalorder %s197, %s213
      %p215 = scmp.eq.s32.totalorder %s21, 0
      %p216 = por %p214, %p215
      %p217 = scmp.le.s32.totalorder 1, %s15
      %p218 = scmp.lt.s32.totalorder %s15, 9
      %p219 = pnand %p217, %p218
      %p220 = pneg %p219
      // Predicated region
      $region9: #{tpu_custom_call.1} parent=5 // pred_check
        _
      $region10: #{tpu_custom_call.1} parent=5 // pred_check_branch
        %222 = sbr.rel (%p219) target = $region12
      $region11: #{tpu_custom_call.1} parent=5 // pred_region
        %s223 = ssub.s32 %s15, 1
      $region12: #{tpu_custom_call.1} parent=5 // pred_fallthru
        _
      %p224 = scmp.lt.s32.totalorder %s15, 8
      // Predicated region
      $region13: #{tpu_custom_call.1} parent=5 // pred_check
        %p225 = pneg %p224
      $region14: #{tpu_custom_call.1} parent=5 // pred_check_branch
        %227 = sbr.rel (%p225) target = $region16
      $region15: #{tpu_custom_call.1} parent=5 // pred_region
        // Predicated region
        $region17: #{tpu_custom_call.1} parent=15 // pred_check
          %p228 = pneg %p47
        $region18: #{tpu_custom_call.1} parent=15 // pred_check_branch
          %230 = sbr.rel (%p228) target = $region20
        $region19: #{tpu_custom_call.1} parent=15 // pred_region
          %s231 = smul.u32 8, %s22
          %p232 = scmp.lt.s32.totalorder %s231, 31
          %s233 = scalar_select %p232, %s231, 31
          %s234 = smul.addr %s233, 8
          %s235 = scalar_lea.vmem %s0, %s234
          %s236 = smul.u32 8, %s22
        $region20: #{tpu_custom_call.1} parent=15 // pred_fallthru
          _
        // Predicated region
        $region21: #{tpu_custom_call.1} parent=15 // pred_check
          %p237 = pneg %p73
        $region22: #{tpu_custom_call.1} parent=15 // pred_check_branch
          %239 = sbr.rel (%p237) target = $region24
        $region23: #{tpu_custom_call.1} parent=15 // pred_region
          %s240 = smul.u32 8, %s22
          %p241 = scmp.lt.s32.totalorder %s240, 31
          %s242 = scalar_select %p241, %s240, 31
          %s243 = smul.addr %s242, 8
          %s244 = scalar_lea.vmem %s1, %s243
          %s245 = smul.u32 8, %s22
        $region24: #{tpu_custom_call.1} parent=15 // pred_fallthru
          _
        // Predicated region
        $region25: #{tpu_custom_call.1} parent=15 // pred_check
          %p246 = pneg %p99
        $region26: #{tpu_custom_call.1} parent=15 // pred_check_branch
          %248 = sbr.rel (%p246) target = $region28
        $region27: #{tpu_custom_call.1} parent=15 // pred_region
          %s249 = smul.u32 8, %s22
          %p250 = scmp.lt.s32.totalorder %s249, 31
          %s251 = scalar_select %p250, %s249, 31
          %s252 = smul.addr %s251, 8
          %s253 = scalar_lea.vmem %s2, %s252
          %s254 = smul.u32 8, %s22
        $region28: #{tpu_custom_call.1} parent=15 // pred_fallthru
          _
        // Predicated region
        $region29: #{tpu_custom_call.1} parent=15 // pred_check
          %p255 = pneg %p125
        $region30: #{tpu_custom_call.1} parent=15 // pred_check_branch
          %257 = sbr.rel (%p255) target = $region32
        $region31: #{tpu_custom_call.1} parent=15 // pred_region
          %s258 = sand.u32 %s115, 1
          %s259 = sand.u32 %s115, 1
          %s260 = smul.addr %s259, 128
          %s261 = scalar_lea.vmem [#allocation2], %s260
          %s262 = smul.addr %s23, 8
          %s263 = scalar_lea.vmem %s3, %s262
          // Predicated region
          $region33: #{tpu_custom_call.1} parent=31 // pred_check
            _
          $region34: #{tpu_custom_call.1} parent=31 // pred_check_branch
            %265 = sbr.rel (0) target = $region36
          $region35: #{tpu_custom_call.1} parent=31 // pred_region
            // Predicated region
            $region37: #{tpu_custom_call.1} parent=35 // pred_check
              _
            $region38: #{tpu_custom_call.1} parent=35 // pred_check_branch
              %267 = sbr.rel (0) target = $region40
            $region39: #{tpu_custom_call.1} parent=35 // pred_region
              // Predicated region
              $region52: #{tpu_custom_call.1} parent=39 // pred_check
                _
              $region53: #{tpu_custom_call.1} parent=39 // pred_check_branch
                %313 = sbr.rel (0) target = $region55
              $region54: #{tpu_custom_call.1} parent=39 // pred_region
                loop: start=0, step=1, limit=1
                $region56: #{tpu_custom_call.1} parent=54 // loop_pre_header
                  _
                $region57: #{tpu_custom_call.1} parent=54 // loop_header
                  %s315 = sphi 0, %s319
                  %p316 = scmp.ge.s32.totalorder %s315, 1
                  %s320 = sphi %s263, %s263
                  %s321 = sphi %s261, %s261
                $region58: #{tpu_custom_call.1} parent=54 // loop_header_branch
                  %318 = sbr.rel (%p316) target = $region62
                $region59: #{tpu_custom_call.1} parent=54 // loop_body
                  %v322 = vld [vmem:[%s320] sm:$0xff]
                  %323 = vst [vmem:[%s321] sm:$0xff] %v322
                  %v324 = vld [vmem:[%s320 + $0x10] sm:$0xff]
                  %325 = vst [vmem:[%s321 + $0x8] sm:$0xff] %v324
                  %v326 = vld [vmem:[%s320 + $0x20] sm:$0xff]
                  %327 = vst [vmem:[%s321 + $0x10] sm:$0xff] %v326
                  %v328 = vld [vmem:[%s320 + $0x30] sm:$0xff]
                  %329 = vst [vmem:[%s321 + $0x18] sm:$0xff] %v328
                  %v330 = vld [vmem:[%s320 + $0x40] sm:$0xff]
                  %331 = vst [vmem:[%s321 + $0x20] sm:$0xff] %v330
                  %v332 = vld [vmem:[%s320 + $0x50] sm:$0xff]
                  %333 = vst [vmem:[%s321 + $0x28] sm:$0xff] %v332
                  %v334 = vld [vmem:[%s320 + $0x60] sm:$0xff]
                  %335 = vst [vmem:[%s321 + $0x30] sm:$0xff] %v334
                  %v336 = vld [vmem:[%s320 + $0x70] sm:$0xff]
                  %337 = vst [vmem:[%s321 + $0x38] sm:$0xff] %v336
                  %v338 = vld [vmem:[%s320 + $0x80] sm:$0xff]
                  %339 = vst [vmem:[%s321 + $0x40] sm:$0xff] %v338
                  %v340 = vld [vmem:[%s320 + $0x90] sm:$0xff]
                  %341 = vst [vmem:[%s321 + $0x48] sm:$0xff] %v340
                  %v342 = vld [vmem:[%s320 + $0xa0] sm:$0xff]
                  %343 = vst [vmem:[%s321 + $0x50] sm:$0xff] %v342
                  %v344 = vld [vmem:[%s320 + $0xb0] sm:$0xff]
                  %345 = vst [vmem:[%s321 + $0x58] sm:$0xff] %v344
                  %v346 = vld [vmem:[%s320 + $0xc0] sm:$0xff]
                  %347 = vst [vmem:[%s321 + $0x60] sm:$0xff] %v346
                  %v348 = vld [vmem:[%s320 + $0xd0] sm:$0xff]
                  %349 = vst [vmem:[%s321 + $0x68] sm:$0xff] %v348
                  %v350 = vld [vmem:[%s320 + $0xe0] sm:$0xff]
                  %351 = vst [vmem:[%s321 + $0x70] sm:$0xff] %v350
                  %v352 = vld [vmem:[%s320 + $0xf0] sm:$0xff]
                  %353 = vst [vmem:[%s321 + $0x78] sm:$0xff] %v352
                $region60: #{tpu_custom_call.1} parent=54 // loop_footer
                  %s319 = sadd.s32 1, %s315
                $region61: #{tpu_custom_call.1} parent=54 // loop_footer_branch
                  %314 = sbr.rel target = $region57
                $region62: #{tpu_custom_call.1} parent=54 // loop_exit
                  _
              $region55: #{tpu_custom_call.1} parent=39 // pred_fallthru
                _
              // Predicated region
              $region63: #{tpu_custom_call.1} parent=39 // pred_check
                _
              $region64: #{tpu_custom_call.1} parent=39 // pred_check_branch
                %355 = sbr.rel target = $region66
              $region65: #{tpu_custom_call.1} parent=39 // pred_region
                _
              $region66: #{tpu_custom_call.1} parent=39 // pred_fallthru
                _
            $region40: #{tpu_custom_call.1} parent=35 // pred_fallthru
              _
            // Predicated region
            $region41: #{tpu_custom_call.1} parent=35 // pred_check
              _
            $region42: #{tpu_custom_call.1} parent=35 // pred_check_branch
              %269 = sbr.rel target = $region44
            $region43: #{tpu_custom_call.1} parent=35 // pred_region
              %s271 = ssub.s32 256, 1
              loop: start=0, step=1, limit=1
              $region45: #{tpu_custom_call.1} parent=43 // loop_pre_header
                _
              $region46: #{tpu_custom_call.1} parent=43 // loop_header
                %s273 = sphi 0, %s277
                %p274 = scmp.ge.s32.totalorder %s273, 1
                %s278 = sphi %s263, %s263
                %s279 = sphi %s261, %s261
              $region47: #{tpu_custom_call.1} parent=43 // loop_header_branch
                %276 = sbr.rel (%p274) target = $region51
              $region48: #{tpu_custom_call.1} parent=43 // loop_body
                %v280 = vld [vmem:[%s278] sm:%s271]
                %281 = vst [vmem:[%s279] sm:%s271] %v280
                %v282 = vld [vmem:[%s278 + $0x10] sm:%s271]
                %283 = vst [vmem:[%s279 + $0x8] sm:%s271] %v282
                %v284 = vld [vmem:[%s278 + $0x20] sm:%s271]
                %285 = vst [vmem:[%s279 + $0x10] sm:%s271] %v284
                %v286 = vld [vmem:[%s278 + $0x30] sm:%s271]
                %287 = vst [vmem:[%s279 + $0x18] sm:%s271] %v286
                %v288 = vld [vmem:[%s278 + $0x40] sm:%s271]
                %289 = vst [vmem:[%s279 + $0x20] sm:%s271] %v288
                %v290 = vld [vmem:[%s278 + $0x50] sm:%s271]
                %291 = vst [vmem:[%s279 + $0x28] sm:%s271] %v290
                %v292 = vld [vmem:[%s278 + $0x60] sm:%s271]
                %293 = vst [vmem:[%s279 + $0x30] sm:%s271] %v292
                %v294 = vld [vmem:[%s278 + $0x70] sm:%s271]
                %295 = vst [vmem:[%s279 + $0x38] sm:%s271] %v294
                %v296 = vld [vmem:[%s278 + $0x80] sm:%s271]
                %297 = vst [vmem:[%s279 + $0x40] sm:%s271] %v296
                %v298 = vld [vmem:[%s278 + $0x90] sm:%s271]
                %299 = vst [vmem:[%s279 + $0x48] sm:%s271] %v298
                %v300 = vld [vmem:[%s278 + $0xa0] sm:%s271]
                %301 = vst [vmem:[%s279 + $0x50] sm:%s271] %v300
                %v302 = vld [vmem:[%s278 + $0xb0] sm:%s271]
                %303 = vst [vmem:[%s279 + $0x58] sm:%s271] %v302
                %v304 = vld [vmem:[%s278 + $0xc0] sm:%s271]
                %305 = vst [vmem:[%s279 + $0x60] sm:%s271] %v304
                %v306 = vld [vmem:[%s278 + $0xd0] sm:%s271]
                %307 = vst [vmem:[%s279 + $0x68] sm:%s271] %v306
                %v308 = vld [vmem:[%s278 + $0xe0] sm:%s271]
                %309 = vst [vmem:[%s279 + $0x70] sm:%s271] %v308
                %v310 = vld [vmem:[%s278 + $0xf0] sm:%s271]
                %311 = vst [vmem:[%s279 + $0x78] sm:%s271] %v310
              $region49: #{tpu_custom_call.1} parent=43 // loop_footer
                %s277 = sadd.s32 1, %s273
              $region50: #{tpu_custom_call.1} parent=43 // loop_footer_branch
                %272 = sbr.rel target = $region46
              $region51: #{tpu_custom_call.1} parent=43 // loop_exit
                _
            $region44: #{tpu_custom_call.1} parent=35 // pred_fallthru
              _
          $region36: #{tpu_custom_call.1} parent=31 // pred_fallthru
            _
          %356 = vnop
        $region32: #{tpu_custom_call.1} parent=15 // pred_fallthru
          _
        // Predicated region
        $region67: #{tpu_custom_call.1} parent=15 // pred_check
          %p357 = pneg %p151
        $region68: #{tpu_custom_call.1} parent=15 // pred_check_branch
          %359 = sbr.rel (%p357) target = $region70
        $region69: #{tpu_custom_call.1} parent=15 // pred_region
          %p360 = scmp.lt.s32.totalorder %s23, 1
          %s361 = scalar_select %p360, %s23, 1
          %s362 = scalar_lea.vmem %s4, %s361
        $region70: #{tpu_custom_call.1} parent=15 // pred_fallthru
          _
        // Predicated region
        $region71: #{tpu_custom_call.1} parent=15 // pred_check
          %p363 = pneg %p177
        $region72: #{tpu_custom_call.1} parent=15 // pred_check_branch
          %365 = sbr.rel (%p363) target = $region74
        $region73: #{tpu_custom_call.1} parent=15 // pred_region
          %p366 = scmp.lt.s32.totalorder %s23, 1
          %s367 = scalar_select %p366, %s23, 1
          %s368 = scalar_lea.vmem %s5, %s367
        $region74: #{tpu_custom_call.1} parent=15 // pred_fallthru
          _
      $region16: #{tpu_custom_call.1} parent=5 // pred_fallthru
        _
      %p369 = scmp.le.s32.totalorder 1, %s15
      %p370 = scmp.lt.s32.totalorder %s15, 9
      %p371 = pnand %p369, %p370
      %p372 = pneg %p371
      // Predicated region
      $region75: #{tpu_custom_call.1} parent=5 // pred_check
        _
      $region76: #{tpu_custom_call.1} parent=5 // pred_check_branch
        %374 = sbr.rel (%p371) target = $region78
      $region77: #{tpu_custom_call.1} parent=5 // pred_region
        %s375 = ssub.s32 %s15, 1
        %s376 = sand.u32 %s118, 1
        %s377 = sand.u32 %s118, 1
        %s378 = smul.addr %s377, 128
        %s379 = scalar_lea.vmem [#allocation2], %s378
        // Predicated region
        $region79: #{tpu_custom_call.1} parent=77 // pred_check
          %p380 = pneg %p131
        $region80: #{tpu_custom_call.1} parent=77 // pred_check_branch
          %382 = sbr.rel (%p380) target = $region82
        $region81: #{tpu_custom_call.1} parent=77 // pred_region
          _
        $region82: #{tpu_custom_call.1} parent=77 // pred_fallthru
          _
        %s383 = smul.u32 8, %s24
        %p384 = scmp.lt.s32.totalorder %s383, 31
        %s385 = scalar_select %p384, %s383, 31
        %s386 = smul.addr %s385, 8
        %s387 = scalar_lea.vmem %s0, %s386
        %p388 = pneg %p53
        %p389 = pneg %p50
        %s390 = smul.u32 8, %s24
        %p391 = scmp.lt.s32.totalorder %s390, 31
        %s392 = scalar_select %p391, %s390, 31
        %s393 = smul.addr %s392, 8
        %s394 = scalar_lea.vmem %s1, %s393
        %p395 = pneg %p79
        %p396 = pneg %p76
        %s397 = smul.u32 8, %s24
        %p398 = scmp.lt.s32.totalorder %s397, 31
        %s399 = scalar_select %p398, %s397, 31
        %s400 = smul.addr %s399, 8
        %s401 = scalar_lea.vmem %s2, %s400
        %p402 = pneg %p105
        %p403 = pneg %p102
        %s404 = sand.u32 %s118, 1
        %s405 = sand.u32 %s118, 1
        %s406 = smul.addr %s405, 128
        %s407 = scalar_lea.vmem [#allocation2], %s406
        %p408 = pneg %p131
        %p409 = pneg %p128
        %p410 = scmp.lt.s32.totalorder %s25, 1
        %s411 = scalar_select %p410, %s25, 1
        %s412 = scalar_lea.vmem %s4, %s411
        %p413 = pneg %p157
        %p414 = pneg %p154
        %p415 = scmp.lt.s32.totalorder %s25, 1
        %s416 = scalar_select %p415, %s25, 1
        %s417 = scalar_lea.vmem %s5, %s416
        %p418 = pneg %p183
        %p419 = pneg %p180
        %p420 = pneg %p209
        %p421 = pneg %p206
        %s422 = sand.u32 %s196, 1
        %s423 = scalar_lea.sflag [#allocation4], %s422
        %s424 = sand.u32 %s196, 1
        %s425 = smul.addr %s424, 8
        %s426 = scalar_lea.vmem [#allocation3], %s425
        %s427 = smul.u32 8, %s24
        %p428 = scmp.lt.s32.totalorder %s427, 31
        %s429 = scalar_select %p428, %s427, 31
        %s430 = smul.addr %s429, 8
        %s431 = scalar_lea.vmem %s0, %s430
        %s432 = smul.u32 8, %s24
        %s433 = smul.u32 8, %s24
        %p434 = scmp.lt.s32.totalorder %s433, 31
        %s435 = scalar_select %p434, %s433, 31
        %s436 = smul.addr %s435, 8
        %s437 = scalar_lea.vmem %s1, %s436
        %s438 = smul.u32 8, %s24
        %s439 = smul.u32 8, %s24
        %p440 = scmp.lt.s32.totalorder %s439, 31
        %s441 = scalar_select %p440, %s439, 31
        %s442 = smul.addr %s441, 8
        %s443 = scalar_lea.vmem %s2, %s442
        %s444 = smul.u32 8, %s24
        %p445 = scmp.lt.s32.totalorder %s25, 1
        %s446 = scalar_select %p445, %s25, 1
        %s447 = scalar_lea.vmem %s4, %s446
        %p448 = scmp.lt.s32.totalorder %s25, 1
        %s449 = scalar_select %p448, %s25, 1
        %s450 = scalar_lea.vmem %s5, %s449
        %p451 = scmp.eq.s32.totalorder %s25, 0
        // Predicated region
        $region83: #{tpu_custom_call.1} parent=77 // pred_check
          %p452 = pneg %p451
        $region84: #{tpu_custom_call.1} parent=77 // pred_check_branch
          %454 = sbr.rel (%p452) target = $region86
        $region85: #{tpu_custom_call.1} parent=77 // pred_region
          %455 = vst [vmem:[%s426] sm:$0xff] 0.0
        $region86: #{tpu_custom_call.1} parent=77 // pred_fallthru
          _
        %s456 = sadd.s32 %s25, 1
        %s457 = smul.u32 %s456, 128
        %s458 = ssub.s32 %s457, 1
        %s459 = smul.u32 %s24, 64
        %p460 = scmp.gt.s32.totalorder %s458, %s459
        // Predicated region
        $region87: #{tpu_custom_call.1} parent=77 // pred_check
          %p461 = pneg %p460
        $region88: #{tpu_custom_call.1} parent=77 // pred_check_branch
          %463 = sbr.rel (%p461) target = $region90
        $region89: #{tpu_custom_call.1} parent=77 // pred_region
          %v464 = vld [vmem:[%s431] sm:$0xff]
          %v465 = vld [vmem:[%s431 + $0x8] sm:$0xff]
          %v466 = vld [vmem:[%s431 + $0x10] sm:$0xff]
          %v467 = vld [vmem:[%s431 + $0x18] sm:$0xff]
          %v468 = vld [vmem:[%s431 + $0x20] sm:$0xff]
          %v469 = vld [vmem:[%s431 + $0x28] sm:$0xff]
          %v470 = vld [vmem:[%s431 + $0x30] sm:$0xff]
          %v471 = vld [vmem:[%s431 + $0x38] sm:$0xff]
          %v472 = vld [vmem:[%s379] sm:$0xff]
          %v473 = vld [vmem:[%s379 + $0x8] sm:$0xff]
          %v474 = vld [vmem:[%s379 + $0x10] sm:$0xff]
          %v475 = vld [vmem:[%s379 + $0x18] sm:$0xff]
          %v476 = vld [vmem:[%s379 + $0x20] sm:$0xff]
          %v477 = vld [vmem:[%s379 + $0x28] sm:$0xff]
          %v478 = vld [vmem:[%s379 + $0x30] sm:$0xff]
          %v479 = vld [vmem:[%s379 + $0x38] sm:$0xff]
          %v480 = vld [vmem:[%s379 + $0x40] sm:$0xff]
          %v481 = vld [vmem:[%s379 + $0x48] sm:$0xff]
          %v482 = vld [vmem:[%s379 + $0x50] sm:$0xff]
          %v483 = vld [vmem:[%s379 + $0x58] sm:$0xff]
          %v484 = vld [vmem:[%s379 + $0x60] sm:$0xff]
          %v485 = vld [vmem:[%s379 + $0x68] sm:$0xff]
          %v486 = vld [vmem:[%s379 + $0x70] sm:$0xff]
          %v487 = vld [vmem:[%s379 + $0x78] sm:$0xff]
          %488 = vmatpush.msra.mxu0 %v487
          %489 = vmatpush.msra.mxu0 %v486
          %490 = vmatpush.msra.mxu0 %v485
          %491 = vmatpush.msra.mxu0 %v484
          %492 = vmatpush.msra.mxu0 %v483
          %493 = vmatpush.msra.mxu0 %v482
          %494 = vmatpush.msra.mxu0 %v481
          %495 = vmatpush.msra.mxu0 %v480
          %496 = vmatpush.msra.mxu0 %v479
          %497 = vmatpush.msra.mxu0 %v478
          %498 = vmatpush.msra.mxu0 %v477
          %499 = vmatpush.msra.mxu0 %v476
          %500 = vmatpush.msra.mxu0 %v475
          %501 = vmatpush.msra.mxu0 %v474
          %502 = vmatpush.msra.mxu0 %v473
          %503 = vmatpush.msra.mxu0 %v472
          %504 = vmatmul.f32.gmra.mxu0 %v464
          %v505 = vpop.f32.mrf.mxu0
          %v506 = vadd.f32 0.0, %v505
          %507 = vmatmul.f32.gmra.mxu0 %v465
          %v508 = vpop.f32.mrf.mxu0
          %v509 = vadd.f32 0.0, %v508
          %510 = vmatmul.f32.gmra.mxu0 %v466
          %v511 = vpop.f32.mrf.mxu0
          %v512 = vadd.f32 0.0, %v511
          %513 = vmatmul.f32.gmra.mxu0 %v467
          %v514 = vpop.f32.mrf.mxu0
          %v515 = vadd.f32 0.0, %v514
          %516 = vmatmul.f32.gmra.mxu0 %v468
          %v517 = vpop.f32.mrf.mxu0
          %v518 = vadd.f32 0.0, %v517
          %519 = vmatmul.f32.gmra.mxu0 %v469
          %v520 = vpop.f32.mrf.mxu0
          %v521 = vadd.f32 0.0, %v520
          %522 = vmatmul.f32.gmra.mxu0 %v470
          %v523 = vpop.f32.mrf.mxu0
          %v524 = vadd.f32 0.0, %v523
          %525 = vmatmul.f32.gmra.mxu0 %v471
          %v526 = vpop.f32.mrf.mxu0
          %v527 = vadd.f32 0.0, %v526
          %528 = vdwg.mxu0
          %v529 = vld [vmem:[%s443] sm:$0xff]
          %v530 = vld [vmem:[%s443 + $0x8] sm:$0xff]
          %v531 = vld [vmem:[%s443 + $0x10] sm:$0xff]
          %v532 = vld [vmem:[%s443 + $0x18] sm:$0xff]
          %v533 = vld [vmem:[%s443 + $0x20] sm:$0xff]
          %v534 = vld [vmem:[%s443 + $0x28] sm:$0xff]
          %v535 = vld [vmem:[%s443 + $0x30] sm:$0xff]
          %v536 = vld [vmem:[%s443 + $0x38] sm:$0xff]
          %v537 = vld [vmem:[%s450] sm:$0x1]
          %539 = vset.pattern.permute.xlu0 0
          %540 = vperm.xlu0 %539, %v529
          %v541 = vpop.permute.xlu0 %540
          %544 = vset.pattern.permute.xlu0 0
          %545 = vperm.xlu0 %544, %v530
          %v546 = vpop.permute.xlu0 %545
          %549 = vset.pattern.permute.xlu0 0
          %550 = vperm.xlu0 %549, %v531
          %v551 = vpop.permute.xlu0 %550
          %554 = vset.pattern.permute.xlu0 0
          %555 = vperm.xlu0 %554, %v532
          %v556 = vpop.permute.xlu0 %555
          %559 = vset.pattern.permute.xlu0 0
          %560 = vperm.xlu0 %559, %v533
          %v561 = vpop.permute.xlu0 %560
          %564 = vset.pattern.permute.xlu0 0
          %565 = vperm.xlu0 %564, %v534
          %v566 = vpop.permute.xlu0 %565
          %569 = vset.pattern.permute.xlu0 0
          %570 = vperm.xlu0 %569, %v535
          %v571 = vpop.permute.xlu0 %570
          %574 = vset.pattern.permute.xlu0 0
          %575 = vperm.xlu0 %574, %v536
          %v576 = vpop.permute.xlu0 %575
          %v579 = vperm.slane %v537, 0
          %v581 = vadd.f32 %v541, %v579
          %v582 = vadd.f32 %v546, %v579
          %v583 = vadd.f32 %v551, %v579
          %v584 = vadd.f32 %v556, %v579
          %v585 = vadd.f32 %v561, %v579
          %v586 = vadd.f32 %v566, %v579
          %v587 = vadd.f32 %v571, %v579
          %v588 = vadd.f32 %v576, %v579
          %v589 = vmul.f32 %v506, 2.0
          %v590 = vmul.f32 %v509, 2.0
          %v591 = vmul.f32 %v512, 2.0
          %v592 = vmul.f32 %v515, 2.0
          %v593 = vmul.f32 %v518, 2.0
          %v594 = vmul.f32 %v521, 2.0
          %v595 = vmul.f32 %v524, 2.0
          %v596 = vmul.f32 %v527, 2.0
          %v597 = vsub.f32 %v581, %v589
          %v598 = vsub.f32 %v582, %v590
          %v599 = vsub.f32 %v583, %v591
          %v600 = vsub.f32 %v584, %v592
          %v601 = vsub.f32 %v585, %v593
          %v602 = vsub.f32 %v586, %v594
          %v603 = vsub.f32 %v587, %v595
          %v604 = vsub.f32 %v588, %v596
          %v605 = vmax.f32 %v597, 0.0
          %v606 = vmax.f32 %v598, 0.0
          %v607 = vmax.f32 %v599, 0.0
          %v608 = vmax.f32 %v600, 0.0
          %v609 = vmax.f32 %v601, 0.0
          %v610 = vmax.f32 %v602, 0.0
          %v611 = vmax.f32 %v603, 0.0
          %v612 = vmax.f32 %v604, 0.0
          %v613 = vrsqrt.pop %v605
          %v614 = vmul.f32 %v613, %v605
          %v615 = vmul.f32 %v614, %v613
          %v616 = vmul.f32 0.5, %v615
          %v617 = vsub.f32 1.5, %v616
          %v618 = vmul.f32 %v613, %v617
          %v619 = vmul.f32 %v605, %v618
          %vm620 = vcmp.eq.f32.partialorder %v605, inf
          %v621 = vsel %vm620, %v605, %v619
          %vm622 = vcmp.eq.f32.partialorder %v605, 0.0
          %v623 = vand.u32 %v605, 2147483648
          %v624 = vsel %vm622, %v623, %v621
          %v625 = vrsqrt.pop %v606
          %v626 = vmul.f32 %v625, %v606
          %v627 = vmul.f32 %v626, %v625
          %v628 = vmul.f32 0.5, %v627
          %v629 = vsub.f32 1.5, %v628
          %v630 = vmul.f32 %v625, %v629
          %v631 = vmul.f32 %v606, %v630
          %vm632 = vcmp.eq.f32.partialorder %v606, inf
          %v633 = vsel %vm632, %v606, %v631
          %vm634 = vcmp.eq.f32.partialorder %v606, 0.0
          %v635 = vand.u32 %v606, 2147483648
          %v636 = vsel %vm634, %v635, %v633
          %v637 = vrsqrt.pop %v607
          %v638 = vmul.f32 %v637, %v607
          %v639 = vmul.f32 %v638, %v637
          %v640 = vmul.f32 0.5, %v639
          %v641 = vsub.f32 1.5, %v640
          %v642 = vmul.f32 %v637, %v641
          %v643 = vmul.f32 %v607, %v642
          %vm644 = vcmp.eq.f32.partialorder %v607, inf
          %v645 = vsel %vm644, %v607, %v643
          %vm646 = vcmp.eq.f32.partialorder %v607, 0.0
          %v647 = vand.u32 %v607, 2147483648
          %v648 = vsel %vm646, %v647, %v645
          %v649 = vrsqrt.pop %v608
          %v650 = vmul.f32 %v649, %v608
          %v651 = vmul.f32 %v650, %v649
          %v652 = vmul.f32 0.5, %v651
          %v653 = vsub.f32 1.5, %v652
          %v654 = vmul.f32 %v649, %v653
          %v655 = vmul.f32 %v608, %v654
          %vm656 = vcmp.eq.f32.partialorder %v608, inf
          %v657 = vsel %vm656, %v608, %v655
          %vm658 = vcmp.eq.f32.partialorder %v608, 0.0
          %v659 = vand.u32 %v608, 2147483648
          %v660 = vsel %vm658, %v659, %v657
          %v661 = vrsqrt.pop %v609
          %v662 = vmul.f32 %v661, %v609
          %v663 = vmul.f32 %v662, %v661
          %v664 = vmul.f32 0.5, %v663
          %v665 = vsub.f32 1.5, %v664
          %v666 = vmul.f32 %v661, %v665
          %v667 = vmul.f32 %v609, %v666
          %vm668 = vcmp.eq.f32.partialorder %v609, inf
          %v669 = vsel %vm668, %v609, %v667
          %vm670 = vcmp.eq.f32.partialorder %v609, 0.0
          %v671 = vand.u32 %v609, 2147483648
          %v672 = vsel %vm670, %v671, %v669
          %v673 = vrsqrt.pop %v610
          %v674 = vmul.f32 %v673, %v610
          %v675 = vmul.f32 %v674, %v673
          %v676 = vmul.f32 0.5, %v675
          %v677 = vsub.f32 1.5, %v676
          %v678 = vmul.f32 %v673, %v677
          %v679 = vmul.f32 %v610, %v678
          %vm680 = vcmp.eq.f32.partialorder %v610, inf
          %v681 = vsel %vm680, %v610, %v679
          %vm682 = vcmp.eq.f32.partialorder %v610, 0.0
          %v683 = vand.u32 %v610, 2147483648
          %v684 = vsel %vm682, %v683, %v681
          %v685 = vrsqrt.pop %v611
          %v686 = vmul.f32 %v685, %v611
          %v687 = vmul.f32 %v686, %v685
          %v688 = vmul.f32 0.5, %v687
          %v689 = vsub.f32 1.5, %v688
          %v690 = vmul.f32 %v685, %v689
          %v691 = vmul.f32 %v611, %v690
          %vm692 = vcmp.eq.f32.partialorder %v611, inf
          %v693 = vsel %vm692, %v611, %v691
          %vm694 = vcmp.eq.f32.partialorder %v611, 0.0
          %v695 = vand.u32 %v611, 2147483648
          %v696 = vsel %vm694, %v695, %v693
          %v697 = vrsqrt.pop %v612
          %v698 = vmul.f32 %v697, %v612
          %v699 = vmul.f32 %v698, %v697
          %v700 = vmul.f32 0.5, %v699
          %v701 = vsub.f32 1.5, %v700
          %v702 = vmul.f32 %v697, %v701
          %v703 = vmul.f32 %v612, %v702
          %vm704 = vcmp.eq.f32.partialorder %v612, inf
          %v705 = vsel %vm704, %v612, %v703
          %vm706 = vcmp.eq.f32.partialorder %v612, 0.0
          %v707 = vand.u32 %v612, 2147483648
          %v708 = vsel %vm706, %v707, %v705
          %v709 = vsub.f32 1.0, %v624
          %v710 = vsub.f32 1.0, %v636
          %v711 = vsub.f32 1.0, %v648
          %v712 = vsub.f32 1.0, %v660
          %v713 = vsub.f32 1.0, %v672
          %v714 = vsub.f32 1.0, %v684
          %v715 = vsub.f32 1.0, %v696
          %v716 = vsub.f32 1.0, %v708
          %v717 = vmax.f32 %v709, 0.0
          %v718 = vmax.f32 %v710, 0.0
          %v719 = vmax.f32 %v711, 0.0
          %v720 = vmax.f32 %v712, 0.0
          %v721 = vmax.f32 %v713, 0.0
          %v722 = vmax.f32 %v714, 0.0
          %v723 = vmax.f32 %v715, 0.0
          %v724 = vmax.f32 %v716, 0.0
          %v725 = vlaneseq
          %v726 = vshrl.u32 %v725, 7
          %v727 = vadd.s32 %v726, 8
          %v728 = vadd.s32 %v726, 16
          %v729 = vadd.s32 %v726, 24
          %v730 = vadd.s32 %v726, 32
          %v731 = vadd.s32 %v726, 40
          %v732 = vadd.s32 %v726, 48
          %v733 = vadd.s32 %v726, 56
          %v734 = vstv %s459
          %v735 = vadd.s32 %v734, %v726
          %v736 = vadd.s32 %v734, %v727
          %v737 = vadd.s32 %v734, %v728
          %v738 = vadd.s32 %v734, %v729
          %v739 = vadd.s32 %v734, %v730
          %v740 = vadd.s32 %v734, %v731
          %v741 = vadd.s32 %v734, %v732
          %v742 = vadd.s32 %v734, %v733
          %s743 = smul.u32 %s25, 128
          %v744 = vlaneseq
          %v745 = vand.u32 %v744, 127
          %v746 = vstv %s743
          %v747 = vadd.s32 %v746, %v745
          %vm748 = vcmp.gt.s32.totalorder %v747, %v735
          %vm749 = vcmp.gt.s32.totalorder %v747, %v736
          %vm750 = vcmp.gt.s32.totalorder %v747, %v737
          %vm751 = vcmp.gt.s32.totalorder %v747, %v738
          %vm752 = vcmp.gt.s32.totalorder %v747, %v739
          %vm753 = vcmp.gt.s32.totalorder %v747, %v740
          %vm754 = vcmp.gt.s32.totalorder %v747, %v741
          %vm755 = vcmp.gt.s32.totalorder %v747, %v742
          %vm756 = vcmp.lt.s32.totalorder %v735, 200
          %vm757 = vcmp.lt.s32.totalorder %v736, 200
          %vm758 = vcmp.lt.s32.totalorder %v737, 200
          %vm759 = vcmp.lt.s32.totalorder %v738, 200
          %vm760 = vcmp.lt.s32.totalorder %v739, 200
          %vm761 = vcmp.lt.s32.totalorder %v740, 200
          %vm762 = vcmp.lt.s32.totalorder %v741, 200
          %vm763 = vcmp.lt.s32.totalorder %v742, 200
          %v764 = vsel %vm756, 1, 0
          %v765 = vsel %vm757, 1, 0
          %v766 = vsel %vm758, 1, 0
          %v767 = vsel %vm759, 1, 0
          %v768 = vsel %vm760, 1, 0
          %v769 = vsel %vm761, 1, 0
          %v770 = vsel %vm762, 1, 0
          %v771 = vsel %vm763, 1, 0
          %vm772 = vcmp.eq.s32.totalorder %v764, 1
          %vm773 = vcmp.eq.s32.totalorder %v765, 1
          %vm774 = vcmp.eq.s32.totalorder %v766, 1
          %vm775 = vcmp.eq.s32.totalorder %v767, 1
          %vm776 = vcmp.eq.s32.totalorder %v768, 1
          %vm777 = vcmp.eq.s32.totalorder %v769, 1
          %vm778 = vcmp.eq.s32.totalorder %v770, 1
          %vm779 = vcmp.eq.s32.totalorder %v771, 1
          %vm780 = vmand %vm748, %vm772
          %vm781 = vmand %vm749, %vm773
          %vm782 = vmand %vm750, %vm774
          %vm783 = vmand %vm751, %vm775
          %vm784 = vmand %vm752, %vm776
          %vm785 = vmand %vm753, %vm777
          %vm786 = vmand %vm754, %vm778
          %vm787 = vmand %vm755, %vm779
          %vm788 = vcmp.lt.s32.totalorder %v747, 200
          %v789 = vsel %vm788, 1, 0
          %vm790 = vcmp.eq.s32.totalorder %v789, 1
          %vm791 = vmand %vm780, %vm790
          %vm792 = vmand %vm781, %vm790
          %vm793 = vmand %vm782, %vm790
          %vm794 = vmand %vm783, %vm790
          %vm795 = vmand %vm784, %vm790
          %vm796 = vmand %vm785, %vm790
          %vm797 = vmand %vm786, %vm790
          %vm798 = vmand %vm787, %vm790
          %v799 = vld [vmem:[%s437] sm:$0xff]
          %v800 = vld [vmem:[%s437 + $0x8] sm:$0xff]
          %v801 = vld [vmem:[%s437 + $0x10] sm:$0xff]
          %v802 = vld [vmem:[%s437 + $0x18] sm:$0xff]
          %v803 = vld [vmem:[%s437 + $0x20] sm:$0xff]
          %v804 = vld [vmem:[%s437 + $0x28] sm:$0xff]
          %v805 = vld [vmem:[%s437 + $0x30] sm:$0xff]
          %v806 = vld [vmem:[%s437 + $0x38] sm:$0xff]
          %v807 = vld [vmem:[%s447] sm:$0x1]
          %808 = vset.pattern.permute.xlu0 0
          %809 = vperm.xlu0 %808, %v799
          %v810 = vpop.permute.xlu0 %809
          %811 = vset.pattern.permute.xlu0 0
          %812 = vperm.xlu0 %811, %v800
          %v813 = vpop.permute.xlu0 %812
          %814 = vset.pattern.permute.xlu0 0
          %815 = vperm.xlu0 %814, %v801
          %v816 = vpop.permute.xlu0 %815
          %817 = vset.pattern.permute.xlu0 0
          %818 = vperm.xlu0 %817, %v802
          %v819 = vpop.permute.xlu0 %818
          %820 = vset.pattern.permute.xlu0 0
          %821 = vperm.xlu0 %820, %v803
          %v822 = vpop.permute.xlu0 %821
          %823 = vset.pattern.permute.xlu0 0
          %824 = vperm.xlu0 %823, %v804
          %v825 = vpop.permute.xlu0 %824
          %826 = vset.pattern.permute.xlu0 0
          %827 = vperm.xlu0 %826, %v805
          %v828 = vpop.permute.xlu0 %827
          %829 = vset.pattern.permute.xlu0 0
          %830 = vperm.xlu0 %829, %v806
          %v831 = vpop.permute.xlu0 %830
          %v832 = vperm.slane %v807, 0
          %vm833 = vcmp.eq.s32.totalorder %v810, %v832
          %vm834 = vcmp.eq.s32.totalorder %v813, %v832
          %vm835 = vcmp.eq.s32.totalorder %v816, %v832
          %vm836 = vcmp.eq.s32.totalorder %v819, %v832
          %vm837 = vcmp.eq.s32.totalorder %v822, %v832
          %vm838 = vcmp.eq.s32.totalorder %v825, %v832
          %vm839 = vcmp.eq.s32.totalorder %v828, %v832
          %vm840 = vcmp.eq.s32.totalorder %v831, %v832
          %v841 = vmul.f32 %v717, %v717
          %v842 = vmul.f32 %v718, %v718
          %v843 = vmul.f32 %v719, %v719
          %v844 = vmul.f32 %v720, %v720
          %v845 = vmul.f32 %v721, %v721
          %v846 = vmul.f32 %v722, %v722
          %v847 = vmul.f32 %v723, %v723
          %v848 = vmul.f32 %v724, %v724
          %v849 = vsel %vm833, %v605, %v841
          %v850 = vsel %vm834, %v606, %v842
          %v851 = vsel %vm835, %v607, %v843
          %v852 = vsel %vm836, %v608, %v844
          %v853 = vsel %vm837, %v609, %v845
          %v854 = vsel %vm838, %v610, %v846
          %v855 = vsel %vm839, %v611, %v847
          %v856 = vsel %vm840, %v612, %v848
          %v857 = vsel %vm791, %v849, 0.0
          %v858 = vsel %vm792, %v850, 0.0
          %v859 = vsel %vm793, %v851, 0.0
          %v860 = vsel %vm794, %v852, 0.0
          %v861 = vsel %vm795, %v853, 0.0
          %v862 = vsel %vm796, %v854, 0.0
          %v863 = vsel %vm797, %v855, 0.0
          %v864 = vsel %vm798, %v856, 0.0
          %v865 = vadd.f32 %v857, %v858
          %v866 = vadd.f32 %v865, %v859
          %v867 = vadd.f32 %v866, %v860
          %v868 = vadd.f32 %v867, %v861
          %v869 = vadd.f32 %v868, %v862
          %v870 = vadd.f32 %v869, %v863
          %v871 = vadd.f32 %v870, %v864
          %v872 = vld [vmem:[%s426] sm:$0xff]
          %v873 = vadd.f32 %v872, %v871
          %874 = vst [vmem:[%s426] sm:$0xff] %v873
        $region90: #{tpu_custom_call.1} parent=77 // pred_fallthru
          _
        %s875 = sand.u32 %s196, 1
        %s876 = scalar_lea.sflag [#allocation4], %s875
        %s877 = sand.u32 %s196, 1
        %s878 = smul.addr %s877, 8
        %s879 = scalar_lea.vmem [#allocation3], %s878
        // Predicated region
        $region91: #{tpu_custom_call.1} parent=77 // pred_check
          %p880 = pneg %p206
        $region92: #{tpu_custom_call.1} parent=77 // pred_check_branch
          %882 = sbr.rel (%p880) target = $region94
        $region93: #{tpu_custom_call.1} parent=77 // pred_region
          %884 = vsyncadd %s876, 0
          %s885 = smul.addr %s24, 8
          %s886 = scalar_lea.hbm %s6, %s885
          %s888 = sshll.u32 %s879, 4
          %s889 = int_to_ptr.vmem [resolvable:$true] %s888
          %s890 = sshll.u32 %s886, 4
          %s891 = int_to_ptr.hbm [resolvable:$true] %s890
          %893 = dma.vmem_to_hbm [thread:$0]  %s889, 128, %s891, %s876
        $region94: #{tpu_custom_call.1} parent=77 // pred_fallthru
          _
      $region78: #{tpu_custom_call.1} parent=5 // pred_fallthru
        _
      %p894 = scmp.le.s32.totalorder 2, %s15
      // Predicated region
      $region95: #{tpu_custom_call.1} parent=5 // pred_check
        %p895 = pneg %p894
      $region96: #{tpu_custom_call.1} parent=5 // pred_check_branch
        %897 = sbr.rel (%p895) target = $region98
      $region97: #{tpu_custom_call.1} parent=5 // pred_region
        %s898 = ssub.s32 %s15, 2
        // Predicated region
        $region99: #{tpu_custom_call.1} parent=97 // pred_check
          %p899 = pneg %p212
        $region100: #{tpu_custom_call.1} parent=97 // pred_check_branch
          %901 = sbr.rel (%p899) target = $region102
        $region101: #{tpu_custom_call.1} parent=97 // pred_region
          %s902 = sand.u32 %s197, 1
          %s903 = scalar_lea.sflag [#allocation4], %s902
          %s904 = sand.u32 %s197, 1
          %s905 = smul.addr %s904, 8
          %s906 = scalar_lea.vmem [#allocation3], %s905
          %908 = dma.done %s903, 128
        $region102: #{tpu_custom_call.1} parent=97 // pred_fallthru
          _
      $region98: #{tpu_custom_call.1} parent=5 // pred_fallthru
        _
    $region6: #{tpu_custom_call.1} parent=1 // loop_footer
      %s19 = sadd.s32 1, %s15
    $region7: #{tpu_custom_call.1} parent=1 // loop_footer_branch
      %14 = sbr.rel target = $region3
    $region8: #{tpu_custom_call.1} parent=1 // loop_exit
      _
    %909 = vsyncpa [#allocation4], 1
    %s910 = scalar_lea.sflag [#allocation4], 1
    %911 = vsyncpa %s910, 1

</llo_original>
